<compile_context>
chip_gen: v7x
topology: tpu7x:2x2x1
jax: 0.10.0
libtpu: 0.0.40
codegen_flags: <defaults>
</compile_context>

<pallas_src>
import functools

import jax
import jax.numpy as jnp
from jax import lax
from jax.experimental import pallas as pl
from jax.experimental.pallas import tpu as pltpu


def _round_up(x, m):
    return (x + m - 1) // m * m


def _bin_embedding_kernel(idx_ref, m_ref, out_ref, *, seq_len, compute_dtype):
    # idx_ref : VMEM [TB, S]  int32            bin ids for this batch tile
    # m_ref   : VMEM [N, N]   compute_dtype    fused emb @ W.T (VMEM resident)
    # out_ref : VMEM [TB, N]  out_dtype
    tb = out_ref.shape[0]
    n = m_ref.shape[0]

    idx = idx_ref[...]                                        # (TB, S)
    iota_n = lax.broadcasted_iota(jnp.int32, (tb, n), 1)      # (TB, N)

    # counts[b, n] = number of occurrences of bin n in x[b, :].
    # Built in f32 on the VPU (exact small integers; v5e has no bf16 VALU).
    # Stays 2-D, so there is no (TB, S, N) one-hot blow-up in vregs.
    if seq_len <= 32:
        # Small static S: fully unrolled compare+add.
        counts = jnp.zeros((tb, n), dtype=jnp.float32)
        for s in range(seq_len):
            counts = counts + (iota_n == idx[:, s:s + 1]).astype(jnp.float32)
    else:
        # Larger S: visible loop keeps code size / register pressure bounded.
        def body(s, c):
            col = lax.dynamic_slice_in_dim(idx, s, 1, axis=1)  # (TB, 1)
            return c + (iota_n == col).astype(jnp.float32)
        counts = lax.fori_loop(0, seq_len, body,
                               jnp.zeros((tb, n), jnp.float32), unroll=True)

    # Single MXU matmul per grid step: (TB, N) @ (N, N) -> (TB, N), f32 acc.
    out = jnp.dot(counts.astype(compute_dtype), m_ref[...],
                  preferred_element_type=jnp.float32)
    out_ref[...] = out.astype(out_ref.dtype)


def bin_embedding(x, emb_table, dec_weight, *, block_b=256,
                  compute_dtype=jnp.float32, out_dtype=jnp.float32):
    """x: [B, S] int; emb_table: [N, E]; dec_weight: [N, E] -> out [B, N].

    compute_dtype=jnp.bfloat16 feeds the MXU bf16 inputs (f32 accumulation)
    for higher matmul throughput on v6e/v7x; the default f32 keeps the
    forward numerically tight against the PyTorch reference.
    """
    B, S = x.shape
    N, E = emb_table.shape
    assert dec_weight.shape == (N, E), "decoder weight must be [N, E]"

    x = x.astype(jnp.int32)

    # Fused constant matrix M = emb @ W.T, computed once in f32 (one XLA
    # matmul, amortized over all grid steps), then cast once to compute_dtype.
    fused = jnp.dot(emb_table.astype(jnp.float32),
                    dec_weight.astype(jnp.float32).T,
                    preferred_element_type=jnp.float32).astype(compute_dtype)

    # Batch tile: big enough to fill MXU rows and amortize per-step overhead,
    # rounded to the sublane granule (8).
    tb = min(block_b, _round_up(B, 8))
    # Ensure >= 2 grid steps when possible so v7x's second TensorCore gets
    # work on the "parallel" axis (a no-op cost on single-TC v5e/v6e).
    if _round_up(B, tb) // tb < 2 and tb >= 16:
        tb = _round_up(tb // 2, 8)
    b_pad = _round_up(B, tb)
    if b_pad != B:
        # Padded rows read bin 0; their outputs are sliced away below.
        x = jnp.pad(x, ((0, b_pad - B), (0, 0)))

    kernel = functools.partial(
        _bin_embedding_kernel, seq_len=S, compute_dtype=compute_dtype)

    out = pl.pallas_call(
        kernel,
        out_shape=jax.ShapeDtypeStruct((b_pad, N), out_dtype),
        grid_spec=pltpu.PrefetchScalarGridSpec(
            num_scalar_prefetch=0,
            grid=(b_pad // tb,),
            in_specs=[
                pl.BlockSpec((tb, S), lambda i: (i, 0)),   # indices (streamed)
                pl.BlockSpec((N, N), lambda i: (0, 0)),    # fused M (resident)
            ],
            out_specs=pl.BlockSpec((tb, N), lambda i: (i, 0)),
        ),
        compiler_params=pltpu.CompilerParams(
            # Single batch axis is parallel -> shardable across v7x's 2 TCs.
            dimension_semantics=("parallel",),
        ),
    )(x, fused)

    return out[:B]


if __name__ == "__main__":
    # Small shapes consistent with the module's forward:
    #   x: [batch, seq] integer bin ids in [0, n_dummy_columns)
    B, S = 4, 8
    n_dummy_columns, embedding_dim = 128, 128

    key = jax.random.PRNGKey(0)
    k_idx, k_emb, k_dec = jax.random.split(key, 3)

    x = jax.random.randint(k_idx, (B, S), 0, n_dummy_columns, dtype=jnp.int32)
    emb_table = jax.random.normal(
        k_emb, (n_dummy_columns, embedding_dim), dtype=jnp.float32)
    bound = 1.0 / (embedding_dim ** 0.5)
    dec_weight = jax.random.uniform(
        k_dec, (n_dummy_columns, embedding_dim),
        minval=-bound, maxval=bound, dtype=jnp.float32)

    out = bin_embedding(x, emb_table, dec_weight)
    out = jax.block_until_ready(out)

    # Pure-JAX reference of the PyTorch forward.
    ref = jnp.sum(emb_table[x] @ dec_weight.T, axis=1)
    assert out.shape == (B, n_dummy_columns)
    assert jnp.allclose(out, ref, atol=2e-4, rtol=2e-4), "mismatch vs reference"

    print("KERNEL_OK")
</pallas_src>

<mosaic_0001>
module attributes {stable_mosaic.version = 11 : i64} {
  func.func @_bin_embedding_kernel(%arg0: i32, %arg1: memref<8x8xi32, #tpu.memory_space<vmem>>, %arg2: memref<128x128xf32, #tpu.memory_space<vmem>>, %arg3: memref<8x128xf32, #tpu.memory_space<vmem>>) attributes {dimension_semantics = [#tpu.dimension_semantics<parallel>], iteration_bounds = array<i64: 1>, scalar_prefetch = 0 : i64, scratch_operands = 0 : i64, tpu.core_type = #tpu.core_type<tc>, window_params = [{transform_indices = @transform_0, window_bounds = array<i64: 8, 8>}, {pipeline_mode = #tpu.pipeline_mode<synchronous>, transform_indices = @transform_1, window_bounds = array<i64: 128, 128>}, {transform_indices = @transform_2, window_bounds = array<i64: 8, 128>}]} {
    %c0 = arith.constant 0 : index
    %c0_0 = arith.constant 0 : index
    %0 = vector.load %arg1[%c0, %c0_0] : memref<8x8xi32, #tpu.memory_space<vmem>>, vector<8x8xi32>
    %1 = tpu.iota {dimensions = array<i32: 1>} : vector<8x128xi32>
    %cst = arith.constant 0.000000e+00 : f32
    %2 = vector.broadcast %cst : f32 to vector<8x128xf32>
    %3 = vector.extract_strided_slice %0 {offsets = [0, 0], sizes = [8, 1], strides = [1, 1]} : vector<8x8xi32> to vector<8x1xi32>
    %4 = vector.broadcast %3 : vector<8x1xi32> to vector<8x128xi32>
    %5 = arith.cmpi eq, %1, %4 : vector<8x128xi32>
    %6 = arith.extui %5 : vector<8x128xi1> to vector<8x128xi32>
    %7 = arith.sitofp %6 : vector<8x128xi32> to vector<8x128xf32>
    %8 = arith.addf %2, %7 : vector<8x128xf32>
    %9 = vector.extract_strided_slice %0 {offsets = [0, 1], sizes = [8, 1], strides = [1, 1]} : vector<8x8xi32> to vector<8x1xi32>
    %10 = vector.broadcast %9 : vector<8x1xi32> to vector<8x128xi32>
    %11 = arith.cmpi eq, %1, %10 : vector<8x128xi32>
    %12 = arith.extui %11 : vector<8x128xi1> to vector<8x128xi32>
    %13 = arith.sitofp %12 : vector<8x128xi32> to vector<8x128xf32>
    %14 = arith.addf %8, %13 : vector<8x128xf32>
    %15 = vector.extract_strided_slice %0 {offsets = [0, 2], sizes = [8, 1], strides = [1, 1]} : vector<8x8xi32> to vector<8x1xi32>
    %16 = vector.broadcast %15 : vector<8x1xi32> to vector<8x128xi32>
    %17 = arith.cmpi eq, %1, %16 : vector<8x128xi32>
    %18 = arith.extui %17 : vector<8x128xi1> to vector<8x128xi32>
    %19 = arith.sitofp %18 : vector<8x128xi32> to vector<8x128xf32>
    %20 = arith.addf %14, %19 : vector<8x128xf32>
    %21 = vector.extract_strided_slice %0 {offsets = [0, 3], sizes = [8, 1], strides = [1, 1]} : vector<8x8xi32> to vector<8x1xi32>
    %22 = vector.broadcast %21 : vector<8x1xi32> to vector<8x128xi32>
    %23 = arith.cmpi eq, %1, %22 : vector<8x128xi32>
    %24 = arith.extui %23 : vector<8x128xi1> to vector<8x128xi32>
    %25 = arith.sitofp %24 : vector<8x128xi32> to vector<8x128xf32>
    %26 = arith.addf %20, %25 : vector<8x128xf32>
    %27 = vector.extract_strided_slice %0 {offsets = [0, 4], sizes = [8, 1], strides = [1, 1]} : vector<8x8xi32> to vector<8x1xi32>
    %28 = vector.broadcast %27 : vector<8x1xi32> to vector<8x128xi32>
    %29 = arith.cmpi eq, %1, %28 : vector<8x128xi32>
    %30 = arith.extui %29 : vector<8x128xi1> to vector<8x128xi32>
    %31 = arith.sitofp %30 : vector<8x128xi32> to vector<8x128xf32>
    %32 = arith.addf %26, %31 : vector<8x128xf32>
    %33 = vector.extract_strided_slice %0 {offsets = [0, 5], sizes = [8, 1], strides = [1, 1]} : vector<8x8xi32> to vector<8x1xi32>
    %34 = vector.broadcast %33 : vector<8x1xi32> to vector<8x128xi32>
    %35 = arith.cmpi eq, %1, %34 : vector<8x128xi32>
    %36 = arith.extui %35 : vector<8x128xi1> to vector<8x128xi32>
    %37 = arith.sitofp %36 : vector<8x128xi32> to vector<8x128xf32>
    %38 = arith.addf %32, %37 : vector<8x128xf32>
    %39 = vector.extract_strided_slice %0 {offsets = [0, 6], sizes = [8, 1], strides = [1, 1]} : vector<8x8xi32> to vector<8x1xi32>
    %40 = vector.broadcast %39 : vector<8x1xi32> to vector<8x128xi32>
    %41 = arith.cmpi eq, %1, %40 : vector<8x128xi32>
    %42 = arith.extui %41 : vector<8x128xi1> to vector<8x128xi32>
    %43 = arith.sitofp %42 : vector<8x128xi32> to vector<8x128xf32>
    %44 = arith.addf %38, %43 : vector<8x128xf32>
    %45 = vector.extract_strided_slice %0 {offsets = [0, 7], sizes = [8, 1], strides = [1, 1]} : vector<8x8xi32> to vector<8x1xi32>
    %46 = vector.broadcast %45 : vector<8x1xi32> to vector<8x128xi32>
    %47 = arith.cmpi eq, %1, %46 : vector<8x128xi32>
    %48 = arith.extui %47 : vector<8x128xi1> to vector<8x128xi32>
    %49 = arith.sitofp %48 : vector<8x128xi32> to vector<8x128xf32>
    %50 = arith.addf %44, %49 : vector<8x128xf32>
    %c0_1 = arith.constant 0 : index
    %c0_2 = arith.constant 0 : index
    %51 = vector.load %arg2[%c0_1, %c0_2] : memref<128x128xf32, #tpu.memory_space<vmem>>, vector<128x128xf32>
    %cst_3 = arith.constant dense<0.000000e+00> : vector<8x128xf32>
    %52 = tpu.matmul %50, %51, %cst_3 {dimension_numbers = #tpu.dot_dimension_numbers<[1], [0], [0], [1], [0, 0, 1, 1], [], []>} : vector<8x128xf32>, vector<128x128xf32>, vector<8x128xf32> -> vector<8x128xf32>
    %c0_4 = arith.constant 0 : index
    %c0_5 = arith.constant 0 : index
    %53 = vector.load %arg3[%c0_4, %c0_5] : memref<8x128xf32, #tpu.memory_space<vmem>>, vector<8x128xf32>
    tpu.vector_store %arg3[%c0_4, %c0_5], %52 {strides = array<i32>} : memref<8x128xf32, #tpu.memory_space<vmem>>, vector<8x128xf32>,
    return
  }
  func.func @transform_0(%arg0: i32) -> (i32, i32) {
    %c0_i32 = arith.constant 0 : i32
    %c0_i32_0 = arith.constant 0 : i32
    return %arg0, %c0_i32 : i32, i32
  }
  func.func @transform_1(%arg0: i32) -> (i32, i32) {
    %c0_i32 = arith.constant 0 : i32
    %c0_i32_0 = arith.constant 0 : i32
    %c0_i32_1 = arith.constant 0 : i32
    return %c0_i32, %c0_i32_0 : i32, i32
  }
  func.func @transform_2(%arg0: i32) -> (i32, i32) {
    %c0_i32 = arith.constant 0 : i32
    %c0_i32_0 = arith.constant 0 : i32
    return %arg0, %c0_i32 : i32, i32
  }
}

</mosaic_0001>

<llo_original>
// kernel: tpu_custom_call.1
$region0: #{tpu_custom_call.1}
  #allocation0 [shape = 'u32[]', space=smem, size = 0x4, offset = 0x4, fixed_abs, tag = 'smem constant byte address 0x4 - core index']
  #allocation1 [shape = 'u32[144,128]{1,0:T(1,128)}', space=vmem, size = 0x12000, scoped, tag = 'internal scratch']
  %s0 = inlined_call_operand.hbm [shape: s32[8,8], index: 0, kind: input, shape index: {}]
  %s1 = inlined_call_operand.hbm [shape: f32[128,128], index: 1, kind: input, shape index: {}]
  %s2 = inlined_call_operand.hbm [shape: f32[8,128], index: 2, kind: output, shape index: {}]
  %s3 = sld [smem:[#allocation0]]
  $region26: #{tpu_custom_call.1} parent=0
    _
  %s5 = ssub.s32 1, %s3
  %s6 = scalar_select 0, %s5, %s3
  $region1: #{tpu_custom_call.1} parent=0
    #allocation2 [shape = 'u8[4096]{0}', space=vmem, size = 0x1000, scoped, tag = 'input window, operand 0, single buffered']
    #allocation3 [shape = 's32[1]{0}', space=sflag, size = 0x4, scoped, tag = 'scoped memory for tpu_custom_call.1']
    #allocation4 [shape = 's32[1]{0}', space=sflag, size = 0x4, scoped, tag = 'scoped memory for tpu_custom_call.1']
    #allocation5 [shape = 'u8[65536]{0}', space=vmem, size = 0x10000, scoped, tag = 'input window, operand 1, single buffered']
    #allocation6 [shape = 's32[1]{0}', space=sflag, size = 0x4, scoped, tag = 'scoped memory for tpu_custom_call.1']
    #allocation7 [shape = 'u8[4096]{0}', space=vmem, size = 0x1000, scoped, tag = 'output window, operand 0, single buffered']
    %7 = vsyncpa [#allocation3], 0
    %8 = vsyncpa [#allocation6], 0
    %9 = vsyncpa [#allocation4], 0
    // Predicated region
    $region2: #{tpu_custom_call.1} parent=1 // pred_check
      _
    $region3: #{tpu_custom_call.1} parent=1 // pred_check_branch
      %11 = sbr.rel (0) target = $region5
    $region4: #{tpu_custom_call.1} parent=1 // pred_region
      %s13 = ssub.s32 128, 128
      %14 = vsyncadd [#allocation3], %s13
      %s16 = sshll.u32 [#allocation2], 4
      %s17 = int_to_ptr.vmem [resolvable:$true] %s16
      %19 = dma.hbm_to_vmem [thread:$0]  %s0, 128, %s17, [#allocation3]
    $region5: #{tpu_custom_call.1} parent=1 // pred_fallthru
      _
    // Predicated region
    $region6: #{tpu_custom_call.1} parent=1 // pred_check
      _
    $region7: #{tpu_custom_call.1} parent=1 // pred_check_branch
      %21 = sbr.rel (0) target = $region9
    $region8: #{tpu_custom_call.1} parent=1 // pred_region
      %s23 = ssub.s32 2048, 2048
      %24 = vsyncadd [#allocation6], %s23
      %s25 = sshll.u32 [#allocation5], 4
      %s26 = int_to_ptr.vmem [resolvable:$true] %s25
      %31 = dma.hbm_to_vmem [thread:$0]  %s1, 2048, %s26, [#allocation6], 128, 128, 8
    $region9: #{tpu_custom_call.1} parent=1 // pred_fallthru
      _
    // Predicated region
    $region10: #{tpu_custom_call.1} parent=1 // pred_check
      _
    $region11: #{tpu_custom_call.1} parent=1 // pred_check_branch
      %33 = sbr.rel (0) target = $region13
    $region12: #{tpu_custom_call.1} parent=1 // pred_region
      %34 = dma.done [#allocation3], 128
    $region13: #{tpu_custom_call.1} parent=1 // pred_fallthru
      _
    // Predicated region
    $region14: #{tpu_custom_call.1} parent=1 // pred_check
      _
    $region15: #{tpu_custom_call.1} parent=1 // pred_check_branch
      %36 = sbr.rel (0) target = $region17
    $region16: #{tpu_custom_call.1} parent=1 // pred_region
      %37 = dma.done [#allocation6], 2048
    $region17: #{tpu_custom_call.1} parent=1 // pred_fallthru
      _
    %v38 = vld [vmem:[#allocation2] sm:$0xff]
    %v39 = vlaneseq
    %v40 = vand.u32 %v39, 127
    %41 = vset.pattern.permute.xlu0 0
    %42 = vperm.xlu0 %41, %v38
    %v43 = vpop.permute.xlu0 %42
    %vm44 = vcmp.eq.s32.totalorder %v40, %v43
    %v45 = vsel %vm44, 1, 0
    %v46 = vcvt.s32.f32 %v45
    %v47 = vadd.f32 %v46, 0.0
    %48 = vset.pattern.permute.xlu0 1
    %49 = vperm.xlu0 %48, %v38
    %v50 = vpop.permute.xlu0 %49
    %vm51 = vcmp.eq.s32.totalorder %v40, %v50
    %v52 = vsel %vm51, 1, 0
    %v53 = vcvt.s32.f32 %v52
    %v54 = vadd.f32 %v47, %v53
    %55 = vset.pattern.permute.xlu0 2
    %56 = vperm.xlu0 %55, %v38
    %v57 = vpop.permute.xlu0 %56
    %vm58 = vcmp.eq.s32.totalorder %v40, %v57
    %v59 = vsel %vm58, 1, 0
    %v60 = vcvt.s32.f32 %v59
    %v61 = vadd.f32 %v54, %v60
    %62 = vset.pattern.permute.xlu0 3
    %63 = vperm.xlu0 %62, %v38
    %v64 = vpop.permute.xlu0 %63
    %vm65 = vcmp.eq.s32.totalorder %v40, %v64
    %v66 = vsel %vm65, 1, 0
    %v67 = vcvt.s32.f32 %v66
    %v68 = vadd.f32 %v61, %v67
    %69 = vset.pattern.permute.xlu0 4
    %70 = vperm.xlu0 %69, %v38
    %v71 = vpop.permute.xlu0 %70
    %vm72 = vcmp.eq.s32.totalorder %v40, %v71
    %v73 = vsel %vm72, 1, 0
    %v74 = vcvt.s32.f32 %v73
    %v75 = vadd.f32 %v68, %v74
    %76 = vset.pattern.permute.xlu0 5
    %77 = vperm.xlu0 %76, %v38
    %v78 = vpop.permute.xlu0 %77
    %vm79 = vcmp.eq.s32.totalorder %v40, %v78
    %v80 = vsel %vm79, 1, 0
    %v81 = vcvt.s32.f32 %v80
    %v82 = vadd.f32 %v75, %v81
    %83 = vset.pattern.permute.xlu0 6
    %84 = vperm.xlu0 %83, %v38
    %v85 = vpop.permute.xlu0 %84
    %vm86 = vcmp.eq.s32.totalorder %v40, %v85
    %v87 = vsel %vm86, 1, 0
    %v88 = vcvt.s32.f32 %v87
    %v89 = vadd.f32 %v82, %v88
    %90 = vset.pattern.permute.xlu0 7
    %91 = vperm.xlu0 %90, %v38
    %v92 = vpop.permute.xlu0 %91
    %vm93 = vcmp.eq.s32.totalorder %v40, %v92
    %v94 = vsel %vm93, 1, 0
    %v95 = vcvt.s32.f32 %v94
    %v96 = vadd.f32 %v89, %v95
    %v97 = vld [vmem:[#allocation5] sm:$0xff]
    %v98 = vld [vmem:[#allocation5 + $0x8] sm:$0xff]
    %v99 = vld [vmem:[#allocation5 + $0x10] sm:$0xff]
    %v100 = vld [vmem:[#allocation5 + $0x18] sm:$0xff]
    %v101 = vld [vmem:[#allocation5 + $0x20] sm:$0xff]
    %v102 = vld [vmem:[#allocation5 + $0x28] sm:$0xff]
    %v103 = vld [vmem:[#allocation5 + $0x30] sm:$0xff]
    %v104 = vld [vmem:[#allocation5 + $0x38] sm:$0xff]
    %v105 = vld [vmem:[#allocation5 + $0x40] sm:$0xff]
    %v106 = vld [vmem:[#allocation5 + $0x48] sm:$0xff]
    %v107 = vld [vmem:[#allocation5 + $0x50] sm:$0xff]
    %v108 = vld [vmem:[#allocation5 + $0x58] sm:$0xff]
    %v109 = vld [vmem:[#allocation5 + $0x60] sm:$0xff]
    %v110 = vld [vmem:[#allocation5 + $0x68] sm:$0xff]
    %v111 = vld [vmem:[#allocation5 + $0x70] sm:$0xff]
    %v112 = vld [vmem:[#allocation5 + $0x78] sm:$0xff]
    %113 = vmatprep.subr.mxu0 0.0
    %114 = vmatpush1.msra.mxu0 %v97
    %115 = vmatprep.subr.mxu0 0.0
    %116 = vmatpush1.msra.mxu0 %v98
    %117 = vmatprep.subr.mxu0 0.0
    %118 = vmatpush1.msra.mxu0 %v99
    %119 = vmatprep.subr.mxu0 0.0
    %120 = vmatpush1.msra.mxu0 %v100
    %121 = vmatprep.subr.mxu0 0.0
    %122 = vmatpush1.msra.mxu0 %v101
    %123 = vmatprep.subr.mxu0 0.0
    %124 = vmatpush1.msra.mxu0 %v102
    %125 = vmatprep.subr.mxu0 0.0
    %126 = vmatpush1.msra.mxu0 %v103
    %127 = vmatprep.subr.mxu0 0.0
    %128 = vmatpush1.msra.mxu0 %v104
    %129 = vmatprep.subr.mxu0 0.0
    %130 = vmatpush1.msra.mxu0 %v105
    %131 = vmatprep.subr.mxu0 0.0
    %132 = vmatpush1.msra.mxu0 %v106
    %133 = vmatprep.subr.mxu0 0.0
    %134 = vmatpush1.msra.mxu0 %v107
    %135 = vmatprep.subr.mxu0 0.0
    %136 = vmatpush1.msra.mxu0 %v108
    %137 = vmatprep.subr.mxu0 0.0
    %138 = vmatpush1.msra.mxu0 %v109
    %139 = vmatprep.subr.mxu0 0.0
    %140 = vmatpush1.msra.mxu0 %v110
    %141 = vmatprep.subr.mxu0 0.0
    %142 = vmatpush1.msra.mxu0 %v111
    %143 = vmatprep.subr.mxu0 0.0
    %144 = vmatpush1.msra.mxu0 %v112
    %145 = vmatprep.subr.mxu0 0.0
    %146 = vmatpush1.msra.mxu0 0.0
    %147 = vmatprep.subr.mxu0 0.0
    %148 = vmatpush1.msra.mxu0 0.0
    %149 = vmatprep.subr.mxu0 0.0
    %150 = vmatpush1.msra.mxu0 0.0
    %151 = vmatprep.subr.mxu0 0.0
    %152 = vmatpush1.msra.mxu0 0.0
    %153 = vmatprep.subr.mxu0 0.0
    %154 = vmatpush1.msra.mxu0 0.0
    %155 = vmatprep.subr.mxu0 0.0
    %156 = vmatpush1.msra.mxu0 0.0
    %157 = vmatprep.subr.mxu0 0.0
    %158 = vmatpush1.msra.mxu0 0.0
    %159 = vmatprep.subr.mxu0 0.0
    %160 = vmatpush1.msra.mxu0 0.0
    %161 = vmatprep.subr.mxu0 0.0
    %162 = vmatpush1.msra.mxu0 0.0
    %163 = vmatprep.subr.mxu0 0.0
    %164 = vmatpush1.msra.mxu0 0.0
    %165 = vmatprep.subr.mxu0 0.0
    %166 = vmatpush1.msra.mxu0 0.0
    %167 = vmatprep.subr.mxu0 0.0
    %168 = vmatpush1.msra.mxu0 0.0
    %169 = vmatprep.subr.mxu0 0.0
    %170 = vmatpush1.msra.mxu0 0.0
    %171 = vmatprep.subr.mxu0 0.0
    %172 = vmatpush1.msra.mxu0 0.0
    %173 = vmatprep.subr.mxu0 0.0
    %174 = vmatpush1.msra.mxu0 0.0
    %175 = vmatprep.subr.mxu0 0.0
    %176 = vmatpush1.msra.mxu0 0.0
    %177 = vmatprep.mubr.f32.mxu0 0.0
    %178 = vmatmul.mubr.f32.gmra.mrb[0].mxu0 %v96
    %v179 = vpop.f32.mrb[0].mxu0
    %v180 = vadd.f32 0.0, %v179
    %v181 = vpop.f32.mrb[0].mxu0
    %182 = vdwg.mxu0
    %183 = vst [vmem:[#allocation7] sm:$0xff] %v180
    // Predicated region
    $region18: #{tpu_custom_call.1} parent=1 // pred_check
      _
    $region19: #{tpu_custom_call.1} parent=1 // pred_check_branch
      %185 = sbr.rel (0) target = $region21
    $region20: #{tpu_custom_call.1} parent=1 // pred_region
      %s187 = ssub.s32 128, 128
      %188 = vsyncadd [#allocation4], %s187
      %s190 = sshll.u32 [#allocation7], 4
      %s191 = int_to_ptr.vmem [resolvable:$true] %s190
      %193 = dma.vmem_to_hbm [thread:$0]  %s191, 128, %s2, [#allocation4]
    $region21: #{tpu_custom_call.1} parent=1 // pred_fallthru
      _
    // Predicated region
    $region22: #{tpu_custom_call.1} parent=1 // pred_check
      _
    $region23: #{tpu_custom_call.1} parent=1 // pred_check_branch
      %195 = sbr.rel (0) target = $region25
    $region24: #{tpu_custom_call.1} parent=1 // pred_region
      %196 = dma.done [#allocation4], 128
    $region25: #{tpu_custom_call.1} parent=1 // pred_fallthru
      _
    %197 = vsyncpa [#allocation3], 1
    %198 = vsyncpa [#allocation6], 1
    %199 = vsyncpa [#allocation4], 1

</llo_original>
